<compile_context>
chip_gen: v5e
topology: v5e:2x2
jax: 0.10.0
libtpu: 0.0.40
codegen_flags: <defaults>
</compile_context>

<pallas_src>
import functools

import jax
import jax.numpy as jnp
from jax import lax
from jax.experimental import pallas as pl
from jax.experimental.pallas import tpu as pltpu


def _pick_tile(n, candidates=(256, 128, 64, 32, 16, 8)):
    for t in candidates:
        if n % t == 0:
            return t
    return n


def _default_vmem_limit():
    # Generation-aware VMEM budget: ~3/4 of physical VMEM (96 MiB on the
    # 128 MiB v5e/v6e, 48 MiB on the 64 MiB v7x); conservative fallback if the
    # hardware query is unavailable.
    try:
        cap = getattr(pltpu.get_tpu_info(), "vmem_capacity_bytes", None)
        if cap:
            return int(min(cap * 3 // 4, 100 * 1024 * 1024))
    except Exception:
        pass
    return 48 * 1024 * 1024


# -----------------------------------------------------------------------------
# Stage 1: K/V projections, hoisted out of the query-tile loop.
# -----------------------------------------------------------------------------
def kv_project_kernel(sam_ref, pls_ref, wkv_sam_ref, wkv_pl_ref,
                      kv_sam_ref, kv_pl_ref):
    f32, bf16 = jnp.float32, jnp.bfloat16
    kv_sam_ref[0] = jnp.dot(sam_ref[0].astype(bf16), wkv_sam_ref[...],
                            preferred_element_type=f32).astype(bf16)
    kv_pl_ref[0] = jnp.dot(pls_ref[0].astype(bf16), wkv_pl_ref[...],
                           preferred_element_type=f32).astype(bf16)


# -----------------------------------------------------------------------------
# Stage 2: cross attention + shared output projection + residual.
# -----------------------------------------------------------------------------
def guidance_attn_kernel(sam_q_ref, pls_q_ref, kv_sam_ref, kv_pl_ref,
                         wq_sam_ref, wq_pl_ref, wproj_ref, bproj_ref,
                         out_sam_ref, out_pl_ref,
                         attn_scr,
                         *, num_heads):
    """One grid step == (batch b, query tile qi). K/V cover the full sequence."""
    f32, bf16 = jnp.float32, jnp.bfloat16

    sam_q = sam_q_ref[0]          # (tq, C) f32 -- kept f32 for the residual add
    pls_q = pls_q_ref[0]          # (tq, C) f32
    tq, C = sam_q.shape
    head_dim = C // num_heads

    # q projections (softmax scale pre-folded into Wq host-side).
    q_pl = jnp.dot(pls_q.astype(bf16), wq_pl_ref[...],
                   preferred_element_type=f32).astype(bf16)            # (tq, C)
    q_sam = jnp.dot(sam_q.astype(bf16), wq_sam_ref[...],
                    preferred_element_type=f32).astype(bf16)           # (tq, C)

    # q @ k.T without materializing a transpose of k.
    dn_qkt = (((1,), (1,)), ((), ()))

    def attend(q, kv_ref, row0):
        # kv_ref: (N, 2C) bf16 ref-view of the pre-projected key/value stream;
        # columns [0, C) = k, [C, 2C) = v; head h owns [h*Dh, (h+1)*Dh) in each.
        # Per-head k/v are loaded via static ref slices (only (N, Dh) live per
        # head, not the whole (N, 2C) block as a value).
        # TODO(synk): for large N, bound per-head live ranges harder by moving
        # heads onto lax.fori_loop / a grid axis (needs dynamic lane slicing).
        for h in range(num_heads):
            lo = h * head_dim
            k_h = kv_ref[:, lo:lo + head_dim]                          # (N, Dh)
            v_h = kv_ref[:, C + lo:C + lo + head_dim]                  # (N, Dh)
            s = lax.dot_general(q[:, lo:lo + head_dim], k_h, dn_qkt,
                                preferred_element_type=f32)            # (tq, N) f32
            s = s - jnp.max(s, axis=-1, keepdims=True)                 # stable softmax
            p = jnp.exp(s)
            rowsum = jnp.sum(p, axis=-1, keepdims=True)                # (tq, 1) f32
            o = jnp.dot(p.astype(bf16), v_h,
                        preferred_element_type=f32)                    # (tq, Dh) f32
            # Deferred normalization: scale the small PV output instead of the
            # (tq, N) probability matrix; approx reciprocal safe (rowsum >= 1).
            o = o * pl.reciprocal(rowsum, approx=True)
            attn_scr[row0:row0 + tq, lo:lo + head_dim] = o.astype(bf16)

    # branch 1: queries from pl_source, k/v from sam, residual with sam
    attend(q_pl, kv_sam_ref.at[0], 0)
    # branch 2: queries from sam, k/v from pl_source, residual with pl_source
    attend(q_sam, kv_pl_ref.at[0], tq)

    # Single stacked output projection for both branches: (2*tq, C) @ (C, C).
    proj = jnp.dot(attn_scr[...], wproj_ref[...], preferred_element_type=f32)
    proj = proj + bproj_ref[...]                                       # (1, C) broadcasts

    out_sam_ref[0] = (proj[:tq] + sam_q).astype(out_sam_ref.dtype)     # f32 residual
    out_pl_ref[0] = (proj[tq:] + pls_q).astype(out_pl_ref.dtype)


def _run(sam, pl_source, wq_sam, wq_pl, wkv_sam, wkv_pl, wproj, bproj,
         num_heads, q_tile, kv_tile, vmem_limit, single_buffer_weights):
    B, N, C = sam.shape
    bf16 = jnp.bfloat16
    nq = N // q_tile
    nkv = N // kv_tile

    if single_buffer_weights:
        # Grid-invariant blocks: the default second pipeline buffer is dead VMEM.
        def w_spec(shape):
            return pl.BlockSpec(shape, lambda b, i: (0, 0),
                                pipeline_mode=pl.Buffered(1))
    else:
        def w_spec(shape):
            return pl.BlockSpec(shape, lambda b, i: (0, 0))

    cparams = pltpu.CompilerParams(
        dimension_semantics=("parallel", "parallel"),
        vmem_limit_bytes=vmem_limit)

    # ---- stage 1: K/V projections, once per token (not per query tile) ------
    x_spec = pl.BlockSpec((1, kv_tile, C), lambda b, i: (b, i, 0))
    kv_out_spec = pl.BlockSpec((1, kv_tile, 2 * C), lambda b, i: (b, i, 0))
    kv_sam, kv_pl = pl.pallas_call(
        kv_project_kernel,
        out_shape=(jax.ShapeDtypeStruct((B, N, 2 * C), bf16),
                   jax.ShapeDtypeStruct((B, N, 2 * C), bf16)),
        grid=(B, nkv),
        in_specs=[x_spec, x_spec, w_spec((C, 2 * C)), w_spec((C, 2 * C))],
        out_specs=(kv_out_spec, kv_out_spec),
        compiler_params=cparams,
    )(sam, pl_source, wkv_sam, wkv_pl)

    # ---- stage 2: attention --------------------------------------------------
    q_spec = pl.BlockSpec((1, q_tile, C), lambda b, qi: (b, qi, 0))
    # qi-constant index_map: projected K/V fetched once per batch element.
    # TODO(synk): for N where two (N, 2C) bf16 streams no longer fit VMEM
    # (first on v7x's 64 MiB), add a kv grid axis with online-softmax
    # accumulation and/or Buffered(1) on these specs.
    kv_spec = pl.BlockSpec((1, N, 2 * C), lambda b, qi: (b, 0, 0))

    kernel = functools.partial(guidance_attn_kernel, num_heads=num_heads)
    return pl.pallas_call(
        kernel,
        out_shape=(jax.ShapeDtypeStruct((B, N, C), sam.dtype),
                   jax.ShapeDtypeStruct((B, N, C), sam.dtype)),
        grid=(B, nq),
        in_specs=[q_spec, q_spec, kv_spec, kv_spec,
                  w_spec((C, C)), w_spec((C, C)),
                  w_spec((C, C)), w_spec((1, C))],
        out_specs=(q_spec, q_spec),
        scratch_shapes=[pltpu.VMEM((2 * q_tile, C), bf16)],
        compiler_params=cparams,
    )(sam, pl_source, kv_sam, kv_pl, wq_sam, wq_pl, wproj, bproj)


def guidance_forward(sam, pl_source, params, num_heads=8, q_tile=None):
    B, N, C = sam.shape
    assert C % num_heads == 0
    scale = (C // num_heads) ** (-0.5)
    bf16, f32 = jnp.bfloat16, jnp.float32

    # Query tile: 256 fills the 256-wide MXU M dim on v6e/v7x; on v5e
    # (4x128^2 MXU) pass q_tile=128 explicitly.
    if q_tile is None:
        q_tile = _pick_tile(N)
    assert N % q_tile == 0 and (q_tile % 8 == 0 or q_tile == N)
    kv_tile = _pick_tile(N)

    # Host-side weight prep: fold the softmax scale into Wq (in f32, before the
    # bf16 cast); all matmul weights are bf16 (f32 MXU accumulation).
    wq_sam = (params["wq_sam"] * scale).astype(bf16)
    wq_pl = (params["wq_pl"] * scale).astype(bf16)
    wkv_sam = params["wkv_sam"].astype(bf16)
    wkv_pl = params["wkv_pl"].astype(bf16)
    wproj = params["wproj"].astype(bf16)
    bproj = params["bproj"].astype(f32)

    vmem_limit = _default_vmem_limit()
    args = (sam, pl_source, wq_sam, wq_pl, wkv_sam, wkv_pl, wproj, bproj,
            num_heads, q_tile, kv_tile, vmem_limit)
    try:
        return _run(*args, single_buffer_weights=True)
    except Exception:
        # TODO(synk): pipeline_mode=pl.Buffered(1) unsupported on this jax
        # build; fall back to default double-buffered weight blocks.
        return _run(*args, single_buffer_weights=False)


if __name__ == "__main__":
    B, N, C, H = 2, 16, 32, 8
    key = jax.random.PRNGKey(0)
    ks = jax.random.split(key, 8)

    # Deterministic synthetic parameters (weights stored as (in, out)).
    params = {
        "wq_sam":  0.05 * jax.random.normal(ks[0], (C, C), jnp.float32),
        "wq_pl":   0.05 * jax.random.normal(ks[1], (C, C), jnp.float32),
        "wkv_sam": 0.05 * jax.random.normal(ks[2], (C, 2 * C), jnp.float32),
        "wkv_pl":  0.05 * jax.random.normal(ks[3], (C, 2 * C), jnp.float32),
        "wproj":   0.05 * jax.random.normal(ks[4], (C, C), jnp.float32),
        "bproj":   0.05 * jax.random.normal(ks[5], (1, C), jnp.float32),
    }
    sam = jax.random.normal(ks[6], (B, N, C), jnp.float32)
    pl_src = jax.random.normal(ks[7], (B, N, C), jnp.float32)

    # q_tile=8 -> two query tiles per batch element, exercising the tiled grid.
    g_sam, g_pl = guidance_forward(sam, pl_src, params, num_heads=H, q_tile=8)
    jax.block_until_ready((g_sam, g_pl))

    # Pure-JAX f32 reference (mirrors the PyTorch forward exactly).
    def reference(sam, pls):
        scale = (C // H) ** (-0.5)

        def split_heads(x):   # (B,N,C) -> (B,H,N,Dh)
            return x.reshape(B, N, H, C // H).transpose(0, 2, 1, 3)

        q_s = split_heads(sam @ params["wq_sam"])
        q_p = split_heads(pls @ params["wq_pl"])
        kv_s = sam @ params["wkv_sam"]
        kv_p = pls @ params["wkv_pl"]
        k_s, v_s = split_heads(kv_s[..., :C]), split_heads(kv_s[..., C:])
        k_p, v_p = split_heads(kv_p[..., :C]), split_heads(kv_p[..., C:])

        def attn(q, k, v):
            s = jnp.einsum("bhnd,bhmd->bhnm", q, k) * scale
            p = jax.nn.softmax(s, axis=-1)
            o = jnp.einsum("bhnm,bhmd->bhnd", p, v)
            return o.transpose(0, 2, 1, 3).reshape(B, N, C)

        o1 = attn(q_p, k_s, v_s) @ params["wproj"] + params["bproj"] + sam
        o2 = attn(q_s, k_p, v_p) @ params["wproj"] + params["bproj"] + pls
        return o1, o2

    r_sam, r_pl = reference(sam, pl_src)
    # Kernel matmuls run with bf16 operands (f32 accumulation) and a bf16 K/V
    # staging tensor -> loosened tolerance vs the pure-f32 reference.
    assert jnp.allclose(g_sam, r_sam, atol=2e-2, rtol=2e-2)
    assert jnp.allclose(g_pl, r_pl, atol=2e-2, rtol=2e-2)

    print("KERNEL_OK")
</pallas_src>

<mosaic_0001>
module attributes {stable_mosaic.version = 11 : i64} {
  func.func @kv_project_kernel(%arg0: i32, %arg1: i32, %arg2: memref<1x16x32xf32, #tpu.memory_space<vmem>>, %arg3: memref<1x16x32xf32, #tpu.memory_space<vmem>>, %arg4: memref<32x64xbf16, #tpu.memory_space<vmem>>, %arg5: memref<32x64xbf16, #tpu.memory_space<vmem>>, %arg6: memref<1x16x64xbf16, #tpu.memory_space<vmem>>, %arg7: memref<1x16x64xbf16, #tpu.memory_space<vmem>>) attributes {dimension_semantics = [#tpu.dimension_semantics<parallel>, #tpu.dimension_semantics<parallel>], iteration_bounds = array<i64: 2, 1>, scalar_prefetch = 0 : i64, scratch_operands = 0 : i64, tpu.core_type = #tpu.core_type<tc>, window_params = [{transform_indices = @transform_0, window_bounds = array<i64: 1, 16, 32>}, {transform_indices = @transform_1, window_bounds = array<i64: 1, 16, 32>}, {pipeline_mode = #tpu.pipeline_mode<synchronous>, transform_indices = @transform_2, window_bounds = array<i64: 32, 64>}, {pipeline_mode = #tpu.pipeline_mode<synchronous>, transform_indices = @transform_3, window_bounds = array<i64: 32, 64>}, {transform_indices = @transform_4, window_bounds = array<i64: 1, 16, 64>}, {transform_indices = @transform_5, window_bounds = array<i64: 1, 16, 64>}]} {
    %c0 = arith.constant 0 : index
    %c0_0 = arith.constant 0 : index
    %c0_1 = arith.constant 0 : index
    %0 = vector.load %arg2[%c0, %c0_0, %c0_1] : memref<1x16x32xf32, #tpu.memory_space<vmem>>, vector<1x16x32xf32>
    %1 = vector.shape_cast %0 : vector<1x16x32xf32> to vector<16x32xf32>
    %2 = arith.truncf %1 : vector<16x32xf32> to vector<16x32xbf16>
    %c0_2 = arith.constant 0 : index
    %c0_3 = arith.constant 0 : index
    %3 = vector.load %arg4[%c0_2, %c0_3] : memref<32x64xbf16, #tpu.memory_space<vmem>>, vector<32x64xbf16>
    %cst = arith.constant dense<0.000000e+00> : vector<16x64xf32>
    %4 = tpu.matmul %2, %3, %cst {dimension_numbers = #tpu.dot_dimension_numbers<[1], [0], [0], [1], [0, 0, 1, 1], [], []>} : vector<16x32xbf16>, vector<32x64xbf16>, vector<16x64xf32> -> vector<16x64xf32>
    %5 = arith.truncf %4 : vector<16x64xf32> to vector<16x64xbf16>
    %c0_4 = arith.constant 0 : index
    %c0_5 = arith.constant 0 : index
    %c0_6 = arith.constant 0 : index
    %6 = vector.load %arg6[%c0_4, %c0_5, %c0_6] : memref<1x16x64xbf16, #tpu.memory_space<vmem>>, vector<1x16x64xbf16>
    %7 = vector.shape_cast %6 : vector<1x16x64xbf16> to vector<16x64xbf16>
    %8 = vector.shape_cast %5 : vector<16x64xbf16> to vector<1x16x64xbf16>
    tpu.vector_store %arg6[%c0_4, %c0_5, %c0_6], %8 {strides = array<i32>} : memref<1x16x64xbf16, #tpu.memory_space<vmem>>, vector<1x16x64xbf16>,
    %c0_7 = arith.constant 0 : index
    %c0_8 = arith.constant 0 : index
    %c0_9 = arith.constant 0 : index
    %9 = vector.load %arg3[%c0_7, %c0_8, %c0_9] : memref<1x16x32xf32, #tpu.memory_space<vmem>>, vector<1x16x32xf32>
    %10 = vector.shape_cast %9 : vector<1x16x32xf32> to vector<16x32xf32>
    %11 = arith.truncf %10 : vector<16x32xf32> to vector<16x32xbf16>
    %c0_10 = arith.constant 0 : index
    %c0_11 = arith.constant 0 : index
    %12 = vector.load %arg5[%c0_10, %c0_11] : memref<32x64xbf16, #tpu.memory_space<vmem>>, vector<32x64xbf16>
    %cst_12 = arith.constant dense<0.000000e+00> : vector<16x64xf32>
    %13 = tpu.matmul %11, %12, %cst_12 {dimension_numbers = #tpu.dot_dimension_numbers<[1], [0], [0], [1], [0, 0, 1, 1], [], []>} : vector<16x32xbf16>, vector<32x64xbf16>, vector<16x64xf32> -> vector<16x64xf32>
    %14 = arith.truncf %13 : vector<16x64xf32> to vector<16x64xbf16>
    %c0_13 = arith.constant 0 : index
    %c0_14 = arith.constant 0 : index
    %c0_15 = arith.constant 0 : index
    %15 = vector.load %arg7[%c0_13, %c0_14, %c0_15] : memref<1x16x64xbf16, #tpu.memory_space<vmem>>, vector<1x16x64xbf16>
    %16 = vector.shape_cast %15 : vector<1x16x64xbf16> to vector<16x64xbf16>
    %17 = vector.shape_cast %14 : vector<16x64xbf16> to vector<1x16x64xbf16>
    tpu.vector_store %arg7[%c0_13, %c0_14, %c0_15], %17 {strides = array<i32>} : memref<1x16x64xbf16, #tpu.memory_space<vmem>>, vector<1x16x64xbf16>,
    return
  }
  func.func @transform_0(%arg0: i32, %arg1: i32) -> (i32, i32, i32) {
    %c0_i32 = arith.constant 0 : i32
    %c0_i32_0 = arith.constant 0 : i32
    return %arg0, %arg1, %c0_i32 : i32, i32, i32
  }
  func.func @transform_1(%arg0: i32, %arg1: i32) -> (i32, i32, i32) {
    %c0_i32 = arith.constant 0 : i32
    %c0_i32_0 = arith.constant 0 : i32
    return %arg0, %arg1, %c0_i32 : i32, i32, i32
  }
  func.func @transform_2(%arg0: i32, %arg1: i32) -> (i32, i32) {
    %c0_i32 = arith.constant 0 : i32
    %c0_i32_0 = arith.constant 0 : i32
    %c0_i32_1 = arith.constant 0 : i32
    return %c0_i32, %c0_i32_0 : i32, i32
  }
  func.func @transform_3(%arg0: i32, %arg1: i32) -> (i32, i32) {
    %c0_i32 = arith.constant 0 : i32
    %c0_i32_0 = arith.constant 0 : i32
    %c0_i32_1 = arith.constant 0 : i32
    return %c0_i32, %c0_i32_0 : i32, i32
  }
  func.func @transform_4(%arg0: i32, %arg1: i32) -> (i32, i32, i32) {
    %c0_i32 = arith.constant 0 : i32
    %c0_i32_0 = arith.constant 0 : i32
    return %arg0, %arg1, %c0_i32 : i32, i32, i32
  }
  func.func @transform_5(%arg0: i32, %arg1: i32) -> (i32, i32, i32) {
    %c0_i32 = arith.constant 0 : i32
    %c0_i32_0 = arith.constant 0 : i32
    return %arg0, %arg1, %c0_i32 : i32, i32, i32
  }
}

module attributes {stable_mosaic.version = 11 : i64} {
  func.func @kv_project_kernel(%arg0: i32, %arg1: i32, %arg2: memref<1x16x32xf32, #tpu.memory_space<vmem>>, %arg3: memref<1x16x32xf32, #tpu.memory_space<vmem>>, %arg4: memref<32x64xbf16, #tpu.memory_space<vmem>>, %arg5: memref<32x64xbf16, #tpu.memory_space<vmem>>, %arg6: memref<1x16x64xbf16, #tpu.memory_space<vmem>>, %arg7: memref<1x16x64xbf16, #tpu.memory_space<vmem>>) attributes {dimension_semantics = [#tpu.dimension_semantics<parallel>, #tpu.dimension_semantics<parallel>], iteration_bounds = array<i64: 2, 1>, scalar_prefetch = 0 : i64, scratch_operands = 0 : i64, tpu.core_type = #tpu.core_type<tc>, window_params = [{transform_indices = @transform_0, window_bounds = array<i64: 1, 16, 32>}, {transform_indices = @transform_1, window_bounds = array<i64: 1, 16, 32>}, {pipeline_mode = #tpu.pipeline_mode<synchronous>, transform_indices = @transform_2, window_bounds = array<i64: 32, 64>}, {pipeline_mode = #tpu.pipeline_mode<synchronous>, transform_indices = @transform_3, window_bounds = array<i64: 32, 64>}, {transform_indices = @transform_4, window_bounds = array<i64: 1, 16, 64>}, {transform_indices = @transform_5, window_bounds = array<i64: 1, 16, 64>}]} {
    %c0 = arith.constant 0 : index
    %c0_0 = arith.constant 0 : index
    %c0_1 = arith.constant 0 : index
    %0 = vector.load %arg2[%c0, %c0_0, %c0_1] : memref<1x16x32xf32, #tpu.memory_space<vmem>>, vector<1x16x32xf32>
    %1 = vector.shape_cast %0 : vector<1x16x32xf32> to vector<16x32xf32>
    %2 = arith.truncf %1 : vector<16x32xf32> to vector<16x32xbf16>
    %c0_2 = arith.constant 0 : index
    %c0_3 = arith.constant 0 : index
    %3 = vector.load %arg4[%c0_2, %c0_3] : memref<32x64xbf16, #tpu.memory_space<vmem>>, vector<32x64xbf16>
    %cst = arith.constant dense<0.000000e+00> : vector<16x64xf32>
    %4 = tpu.matmul %2, %3, %cst {dimension_numbers = #tpu.dot_dimension_numbers<[1], [0], [0], [1], [0, 0, 1, 1], [], []>} : vector<16x32xbf16>, vector<32x64xbf16>, vector<16x64xf32> -> vector<16x64xf32>
    %5 = arith.truncf %4 : vector<16x64xf32> to vector<16x64xbf16>
    %c0_4 = arith.constant 0 : index
    %c0_5 = arith.constant 0 : index
    %c0_6 = arith.constant 0 : index
    %6 = vector.load %arg6[%c0_4, %c0_5, %c0_6] : memref<1x16x64xbf16, #tpu.memory_space<vmem>>, vector<1x16x64xbf16>
    %7 = vector.shape_cast %6 : vector<1x16x64xbf16> to vector<16x64xbf16>
    %8 = vector.shape_cast %5 : vector<16x64xbf16> to vector<1x16x64xbf16>
    tpu.vector_store %arg6[%c0_4, %c0_5, %c0_6], %8 {strides = array<i32>} : memref<1x16x64xbf16, #tpu.memory_space<vmem>>, vector<1x16x64xbf16>,
    %c0_7 = arith.constant 0 : index
    %c0_8 = arith.constant 0 : index
    %c0_9 = arith.constant 0 : index
    %9 = vector.load %arg3[%c0_7, %c0_8, %c0_9] : memref<1x16x32xf32, #tpu.memory_space<vmem>>, vector<1x16x32xf32>
    %10 = vector.shape_cast %9 : vector<1x16x32xf32> to vector<16x32xf32>
    %11 = arith.truncf %10 : vector<16x32xf32> to vector<16x32xbf16>
    %c0_10 = arith.constant 0 : index
    %c0_11 = arith.constant 0 : index
    %12 = vector.load %arg5[%c0_10, %c0_11] : memref<32x64xbf16, #tpu.memory_space<vmem>>, vector<32x64xbf16>
    %cst_12 = arith.constant dense<0.000000e+00> : vector<16x64xf32>
    %13 = tpu.matmul %11, %12, %cst_12 {dimension_numbers = #tpu.dot_dimension_numbers<[1], [0], [0], [1], [0, 0, 1, 1], [], []>} : vector<16x32xbf16>, vector<32x64xbf16>, vector<16x64xf32> -> vector<16x64xf32>
    %14 = arith.truncf %13 : vector<16x64xf32> to vector<16x64xbf16>
    %c0_13 = arith.constant 0 : index
    %c0_14 = arith.constant 0 : index
    %c0_15 = arith.constant 0 : index
    %15 = vector.load %arg7[%c0_13, %c0_14, %c0_15] : memref<1x16x64xbf16, #tpu.memory_space<vmem>>, vector<1x16x64xbf16>
    %16 = vector.shape_cast %15 : vector<1x16x64xbf16> to vector<16x64xbf16>
    %17 = vector.shape_cast %14 : vector<16x64xbf16> to vector<1x16x64xbf16>
    tpu.vector_store %arg7[%c0_13, %c0_14, %c0_15], %17 {strides = array<i32>} : memref<1x16x64xbf16, #tpu.memory_space<vmem>>, vector<1x16x64xbf16>,
    return
  }
  func.func @transform_0(%arg0: i32, %arg1: i32) -> (i32, i32, i32) {
    %c0_i32 = arith.constant 0 : i32
    %c0_i32_0 = arith.constant 0 : i32
    return %arg0, %arg1, %c0_i32 : i32, i32, i32
  }
  func.func @transform_1(%arg0: i32, %arg1: i32) -> (i32, i32, i32) {
    %c0_i32 = arith.constant 0 : i32
    %c0_i32_0 = arith.constant 0 : i32
    return %arg0, %arg1, %c0_i32 : i32, i32, i32
  }
  func.func @transform_2(%arg0: i32, %arg1: i32) -> (i32, i32) {
    %c0_i32 = arith.constant 0 : i32
    %c0_i32_0 = arith.constant 0 : i32
    %c0_i32_1 = arith.constant 0 : i32
    return %c0_i32, %c0_i32_0 : i32, i32
  }
  func.func @transform_3(%arg0: i32, %arg1: i32) -> (i32, i32) {
    %c0_i32 = arith.constant 0 : i32
    %c0_i32_0 = arith.constant 0 : i32
    %c0_i32_1 = arith.constant 0 : i32
    return %c0_i32, %c0_i32_0 : i32, i32
  }
  func.func @transform_4(%arg0: i32, %arg1: i32) -> (i32, i32, i32) {
    %c0_i32 = arith.constant 0 : i32
    %c0_i32_0 = arith.constant 0 : i32
    return %arg0, %arg1, %c0_i32 : i32, i32, i32
  }
  func.func @transform_5(%arg0: i32, %arg1: i32) -> (i32, i32, i32) {
    %c0_i32 = arith.constant 0 : i32
    %c0_i32_0 = arith.constant 0 : i32
    return %arg0, %arg1, %c0_i32 : i32, i32, i32
  }
}

</mosaic_0001>

<llo_original>
// kernel: tpu_custom_call.1
$region0: #{tpu_custom_call.1}
  #allocation0 [shape = 'u32[]', space=smem, size = 0x4, offset = 0x4, fixed_abs, tag = 'smem constant byte address 0x4 - core index']
  #allocation1 [shape = 'u32[72,128]{1,0:T(1,128)}', space=vmem, size = 0x9000, scoped, tag = 'internal scratch']
  %s0 = inlined_call_operand.hbm [shape: f32[2,16,32], index: 0, kind: input, shape index: {}]
  %s1 = inlined_call_operand.hbm [shape: f32[2,16,32], index: 1, kind: input, shape index: {}]
  %s2 = inlined_call_operand.hbm [shape: bf16[32,64], index: 2, kind: input, shape index: {}]
  %s3 = inlined_call_operand.hbm [shape: bf16[32,64], index: 3, kind: input, shape index: {}]
  %s4 = inlined_call_operand.hbm [shape: bf16[2,16,64], index: 4, kind: output, shape index: {0}]
  %s5 = inlined_call_operand.hbm [shape: bf16[2,16,64], index: 5, kind: output, shape index: {1}]
  %6 = xla_tuple %s4, %s5
  %s7 = sld [smem:[#allocation0]]
  $region73: #{tpu_custom_call.1} parent=0
    _
  %s9 = ssub.s32 1, %s7
  %s10 = scalar_select 0, %s9, %s7
  $region1: #{tpu_custom_call.1} parent=0
    #allocation2 [shape = 'u8[16384]{0}', space=vmem, size = 0x4000, scoped, tag = 'input window, operand 0']
    #allocation3 [shape = 's32[2]{0}', space=sflag, size = 0x8, scoped, tag = 'scoped memory for tpu_custom_call.1']
    #allocation4 [shape = 's32[2]{0}', space=sflag, size = 0x8, scoped, tag = 'scoped memory for tpu_custom_call.1']
    #allocation5 [shape = 'u8[16384]{0}', space=vmem, size = 0x4000, scoped, tag = 'input window, operand 1']
    #allocation6 [shape = 's32[2]{0}', space=sflag, size = 0x8, scoped, tag = 'scoped memory for tpu_custom_call.1']
    #allocation7 [shape = 'u8[8192]{0}', space=vmem, size = 0x2000, scoped, tag = 'input window, operand 2, single buffered']
    #allocation8 [shape = 'u8[8192]{0}', space=vmem, size = 0x2000, scoped, tag = 'input window, operand 3, single buffered']
    #allocation9 [shape = 's32[1]{0}', space=sflag, size = 0x4, scoped, tag = 'scoped memory for tpu_custom_call.1']
    #allocation10 [shape = 'u8[8192]{0}', space=vmem, size = 0x2000, scoped, tag = 'output window, operand 0']
    #allocation11 [shape = 'u8[8192]{0}', space=vmem, size = 0x2000, scoped, tag = 'output window, operand 1']
    #allocation12 [shape = 's32[2]{0}', space=sflag, size = 0x8, scoped, tag = 'scoped memory for tpu_custom_call.1']
    %11 = vsyncpa [#allocation3], 0
    %s12 = scalar_lea.sflag [#allocation3], 1
    %13 = vsyncpa %s12, 0
    %14 = vsyncpa [#allocation6], 0
    %s15 = scalar_lea.sflag [#allocation6], 1
    %16 = vsyncpa %s15, 0
    %17 = vsyncpa [#allocation9], 0
    %18 = vsyncpa [#allocation4], 0
    %s19 = scalar_lea.sflag [#allocation4], 1
    %20 = vsyncpa %s19, 0
    %21 = vsyncpa [#allocation12], 0
    %s22 = scalar_lea.sflag [#allocation12], 1
    %23 = vsyncpa %s22, 0
    loop: start=0, step=1, limit=4
    $region2: #{tpu_custom_call.1} parent=1 // loop_pre_header
      _
    $region3: #{tpu_custom_call.1} parent=1 // loop_header
      %s25 = sphi 0, %s29
      %p26 = scmp.ge.s32.totalorder %s25, 4
      %s32 = sphi 0, %s44
      %s33 = sphi 0, %s40
      %s34 = sphi 0, %s32
      %s35 = sphi 0, %s33
      %s36 = sphi 0, %s34
      %s37 = sphi 0, %s35
      %s49 = sphi 0, %s51
      %s52 = sphi 0, %s49
      %s53 = sphi 0, %s52
      %s69 = sphi 0, %s53
      %s77 = sphi 0, %s79
      %s80 = sphi 0, %s77
      %s81 = sphi 0, %s80
      %s97 = sphi 0, %s81
      %s101 = sphi 0, %s101
      %s103 = sphi 0, %s101
      %s104 = sphi 0, %s103
      %s118 = sphi 0, %s104
      %s122 = sphi 0, %s122
      %s124 = sphi 0, %s122
      %s125 = sphi 0, %s124
      %s139 = sphi 0, %s125
      %s147 = sphi 0, %s149
      %s150 = sphi 0, %s147
      %s151 = sphi 0, %s150
      %s167 = sphi 0, %s151
      %s175 = sphi 0, %s177
      %s178 = sphi 0, %s175
      %s179 = sphi 0, %s178
      %s195 = sphi 0, %s179
    $region4: #{tpu_custom_call.1} parent=1 // loop_header_branch
      %28 = sbr.rel (%p26) target = $region8
    $region5: #{tpu_custom_call.1} parent=1 // loop_body
      %s30 = ssub.s32 %s25, 1
      %s31 = ssub.s32 %s25, 2
      %s38 = sadd.s32 1, %s33
      %p39 = scmp.ge.s32.totalorder %s38, 1
      %s40 = scalar_select %p39, 0, %s38
      %s41 = sadd.s32 1, %s32
      %s42 = scalar_select %p39, %s41, %s32
      %p43 = scmp.ge.s32.totalorder %s42, 2
      %s44 = scalar_select %p43, 0, %s42
      %s45 = ssub.s32 %s32, %s44
      %s46 = ssub.s32 %s33, %s40
      %s47 = sor.u32 %s45, %s46
      %p48 = scmp.eq.s32.totalorder %s47, 0
      %s50 = sadd.s32 %s49, 1
      %s51 = scalar_select %p48, %s49, %s50
      %p54 = pneg %p48
      %p55 = scmp.eq.s32.totalorder %s25, 1
      %p56 = por %p54, %p55
      %p57 = scmp.ne.s32.totalorder %s49, %s52
      %p58 = scmp.eq.s32.totalorder %s25, 0
      %p59 = por %p57, %p58
      %p60 = scmp.ne.s32.totalorder %s49, %s52
      %p61 = scmp.eq.s32.totalorder %s30, 1
      %p62 = por %p60, %p61
      %p63 = scmp.ne.s32.totalorder %s52, %s53
      %p64 = scmp.eq.s32.totalorder %s30, 0
      %p65 = por %p63, %p64
      %p66 = scmp.ne.s32.totalorder %s52, %s53
      %p67 = scmp.eq.s32.totalorder %s31, 1
      %p68 = por %p66, %p67
      %p70 = scmp.ne.s32.totalorder %s53, %s69
      %p71 = scmp.eq.s32.totalorder %s31, 0
      %p72 = por %p70, %p71
      %s73 = ssub.s32 %s32, %s44
      %s74 = ssub.s32 %s33, %s40
      %s75 = sor.u32 %s73, %s74
      %p76 = scmp.eq.s32.totalorder %s75, 0
      %s78 = sadd.s32 %s77, 1
      %s79 = scalar_select %p76, %s77, %s78
      %p82 = pneg %p76
      %p83 = scmp.eq.s32.totalorder %s25, 1
      %p84 = por %p82, %p83
      %p85 = scmp.ne.s32.totalorder %s77, %s80
      %p86 = scmp.eq.s32.totalorder %s25, 0
      %p87 = por %p85, %p86
      %p88 = scmp.ne.s32.totalorder %s77, %s80
      %p89 = scmp.eq.s32.totalorder %s30, 1
      %p90 = por %p88, %p89
      %p91 = scmp.ne.s32.totalorder %s80, %s81
      %p92 = scmp.eq.s32.totalorder %s30, 0
      %p93 = por %p91, %p92
      %p94 = scmp.ne.s32.totalorder %s80, %s81
      %p95 = scmp.eq.s32.totalorder %s31, 1
      %p96 = por %p94, %p95
      %p98 = scmp.ne.s32.totalorder %s81, %s97
      %p99 = scmp.eq.s32.totalorder %s31, 0
      %p100 = por %p98, %p99
      %s102 = sadd.s32 %s101, 1
      %p105 = scmp.eq.s32.totalorder %s25, 1
      %p106 = scmp.ne.s32.totalorder %s101, %s103
      %p107 = scmp.eq.s32.totalorder %s25, 0
      %p108 = por %p106, %p107
      %p109 = scmp.ne.s32.totalorder %s101, %s103
      %p110 = scmp.eq.s32.totalorder %s30, 1
      %p111 = por %p109, %p110
      %p112 = scmp.ne.s32.totalorder %s103, %s104
      %p113 = scmp.eq.s32.totalorder %s30, 0
      %p114 = por %p112, %p113
      %p115 = scmp.ne.s32.totalorder %s103, %s104
      %p116 = scmp.eq.s32.totalorder %s31, 1
      %p117 = por %p115, %p116
      %p119 = scmp.ne.s32.totalorder %s104, %s118
      %p120 = scmp.eq.s32.totalorder %s31, 0
      %p121 = por %p119, %p120
      %s123 = sadd.s32 %s122, 1
      %p126 = scmp.eq.s32.totalorder %s25, 1
      %p127 = scmp.ne.s32.totalorder %s122, %s124
      %p128 = scmp.eq.s32.totalorder %s25, 0
      %p129 = por %p127, %p128
      %p130 = scmp.ne.s32.totalorder %s122, %s124
      %p131 = scmp.eq.s32.totalorder %s30, 1
      %p132 = por %p130, %p131
      %p133 = scmp.ne.s32.totalorder %s124, %s125
      %p134 = scmp.eq.s32.totalorder %s30, 0
      %p135 = por %p133, %p134
      %p136 = scmp.ne.s32.totalorder %s124, %s125
      %p137 = scmp.eq.s32.totalorder %s31, 1
      %p138 = por %p136, %p137
      %p140 = scmp.ne.s32.totalorder %s125, %s139
      %p141 = scmp.eq.s32.totalorder %s31, 0
      %p142 = por %p140, %p141
      %s143 = ssub.s32 %s32, %s44
      %s144 = ssub.s32 %s33, %s40
      %s145 = sor.u32 %s143, %s144
      %p146 = scmp.eq.s32.totalorder %s145, 0
      %s148 = sadd.s32 %s147, 1
      %s149 = scalar_select %p146, %s147, %s148
      %p152 = pneg %p146
      %p153 = scmp.eq.s32.totalorder %s25, 1
      %p154 = por %p152, %p153
      %p155 = scmp.ne.s32.totalorder %s147, %s150
      %p156 = scmp.eq.s32.totalorder %s25, 0
      %p157 = por %p155, %p156
      %p158 = scmp.ne.s32.totalorder %s147, %s150
      %p159 = scmp.eq.s32.totalorder %s30, 1
      %p160 = por %p158, %p159
      %p161 = scmp.ne.s32.totalorder %s150, %s151
      %p162 = scmp.eq.s32.totalorder %s30, 0
      %p163 = por %p161, %p162
      %p164 = scmp.ne.s32.totalorder %s150, %s151
      %p165 = scmp.eq.s32.totalorder %s31, 1
      %p166 = por %p164, %p165
      %p168 = scmp.ne.s32.totalorder %s151, %s167
      %p169 = scmp.eq.s32.totalorder %s31, 0
      %p170 = por %p168, %p169
      %s171 = ssub.s32 %s32, %s44
      %s172 = ssub.s32 %s33, %s40
      %s173 = sor.u32 %s171, %s172
      %p174 = scmp.eq.s32.totalorder %s173, 0
      %s176 = sadd.s32 %s175, 1
      %s177 = scalar_select %p174, %s175, %s176
      %p180 = pneg %p174
      %p181 = scmp.eq.s32.totalorder %s25, 1
      %p182 = por %p180, %p181
      %p183 = scmp.ne.s32.totalorder %s175, %s178
      %p184 = scmp.eq.s32.totalorder %s25, 0
      %p185 = por %p183, %p184
      %p186 = scmp.ne.s32.totalorder %s175, %s178
      %p187 = scmp.eq.s32.totalorder %s30, 1
      %p188 = por %p186, %p187
      %p189 = scmp.ne.s32.totalorder %s178, %s179
      %p190 = scmp.eq.s32.totalorder %s30, 0
      %p191 = por %p189, %p190
      %p192 = scmp.ne.s32.totalorder %s178, %s179
      %p193 = scmp.eq.s32.totalorder %s31, 1
      %p194 = por %p192, %p193
      %p196 = scmp.ne.s32.totalorder %s179, %s195
      %p197 = scmp.eq.s32.totalorder %s31, 0
      %p198 = por %p196, %p197
      %p199 = scmp.le.s32.totalorder 1, %s25
      %p200 = scmp.lt.s32.totalorder %s25, 3
      %p201 = pnand %p199, %p200
      %p202 = pneg %p201
      // Predicated region
      $region9: #{tpu_custom_call.1} parent=5 // pred_check
        _
      $region10: #{tpu_custom_call.1} parent=5 // pred_check_branch
        %204 = sbr.rel (%p201) target = $region12
      $region11: #{tpu_custom_call.1} parent=5 // pred_region
        %s205 = ssub.s32 %s25, 1
        // Predicated region
        $region13: #{tpu_custom_call.1} parent=11 // pred_check
          %p206 = pneg %p114
        $region14: #{tpu_custom_call.1} parent=11 // pred_check_branch
          %208 = sbr.rel (%p206) target = $region16
        $region15: #{tpu_custom_call.1} parent=11 // pred_region
          %210 = vsyncadd [#allocation6], 0
          %s211 = sshll.u32 %s2, 4
          %s212 = int_to_ptr.hbm [resolvable:$true] %s211
          %s213 = sshll.u32 [#allocation7], 4
          %s214 = int_to_ptr.vmem [resolvable:$true] %s213
          %219 = dma.hbm_to_vmem [thread:$0]  %s212, 256, %s214, [#allocation6], 64, 64, 4
        $region16: #{tpu_custom_call.1} parent=11 // pred_fallthru
          _
        // Predicated region
        $region17: #{tpu_custom_call.1} parent=11 // pred_check
          %p220 = pneg %p135
        $region18: #{tpu_custom_call.1} parent=11 // pred_check_branch
          %222 = sbr.rel (%p220) target = $region20
        $region19: #{tpu_custom_call.1} parent=11 // pred_region
          %224 = vsyncadd [#allocation9], 0
          %s225 = sshll.u32 %s3, 4
          %s226 = int_to_ptr.hbm [resolvable:$true] %s225
          %s227 = sshll.u32 [#allocation8], 4
          %s228 = int_to_ptr.vmem [resolvable:$true] %s227
          %233 = dma.hbm_to_vmem [thread:$0]  %s226, 256, %s228, [#allocation9], 64, 64, 4
        $region20: #{tpu_custom_call.1} parent=11 // pred_fallthru
          _
      $region12: #{tpu_custom_call.1} parent=5 // pred_fallthru
        _
      %p234 = scmp.lt.s32.totalorder %s25, 2
      // Predicated region
      $region21: #{tpu_custom_call.1} parent=5 // pred_check
        %p235 = pneg %p234
      $region22: #{tpu_custom_call.1} parent=5 // pred_check_branch
        %237 = sbr.rel (%p235) target = $region24
      $region23: #{tpu_custom_call.1} parent=5 // pred_region
        // Predicated region
        $region25: #{tpu_custom_call.1} parent=23 // pred_check
          %p238 = pneg %p59
        $region26: #{tpu_custom_call.1} parent=23 // pred_check_branch
          %240 = sbr.rel (%p238) target = $region28
        $region27: #{tpu_custom_call.1} parent=23 // pred_region
          %s241 = sand.u32 %s49, 1
          %s242 = scalar_lea.sflag [#allocation3], %s241
          %s243 = sand.u32 %s49, 1
          %s244 = smul.addr %s243, 16
          %s245 = scalar_lea.vmem [#allocation2], %s244
          %s246 = smul.u32 2, %s33
          %248 = vsyncadd %s242, 0
          %s249 = smul.addr %s32, 2
          %s250 = sadd.s32 %s246, %s249
          %s251 = smul.addr %s250, 8
          %s252 = scalar_lea.hbm %s0, %s251
          %s253 = sshll.u32 %s252, 4
          %s254 = int_to_ptr.hbm [resolvable:$true] %s253
          %s255 = sshll.u32 %s245, 4
          %s256 = int_to_ptr.vmem [resolvable:$true] %s255
          %261 = dma.hbm_to_vmem [thread:$0]  %s254, 256, %s256, %s242, 128, 128, 8
        $region28: #{tpu_custom_call.1} parent=23 // pred_fallthru
          _
        // Predicated region
        $region29: #{tpu_custom_call.1} parent=23 // pred_check
          %p262 = pneg %p87
        $region30: #{tpu_custom_call.1} parent=23 // pred_check_branch
          %264 = sbr.rel (%p262) target = $region32
        $region31: #{tpu_custom_call.1} parent=23 // pred_region
          %s265 = sand.u32 %s25, 1
          %s266 = scalar_lea.sflag [#allocation6], %s265
          %s267 = sand.u32 %s77, 1
          %s268 = smul.addr %s267, 16
          %s269 = scalar_lea.vmem [#allocation5], %s268
          %s270 = smul.u32 2, %s33
          %272 = vsyncadd %s266, 0
          %s273 = smul.addr %s32, 2
          %s274 = sadd.s32 %s270, %s273
          %s275 = smul.addr %s274, 8
          %s276 = scalar_lea.hbm %s1, %s275
          %s277 = sshll.u32 %s276, 4
          %s278 = int_to_ptr.hbm [resolvable:$true] %s277
          %s279 = sshll.u32 %s269, 4
          %s280 = int_to_ptr.vmem [resolvable:$true] %s279
          %285 = dma.hbm_to_vmem [thread:$0]  %s278, 256, %s280, %s266, 128, 128, 8
        $region32: #{tpu_custom_call.1} parent=23 // pred_fallthru
          _
      $region24: #{tpu_custom_call.1} parent=5 // pred_fallthru
        _
      %p286 = scmp.le.s32.totalorder 1, %s25
      %p287 = scmp.lt.s32.totalorder %s25, 3
      %p288 = pnand %p286, %p287
      %p289 = pneg %p288
      // Predicated region
      $region33: #{tpu_custom_call.1} parent=5 // pred_check
        _
      $region34: #{tpu_custom_call.1} parent=5 // pred_check_branch
        %291 = sbr.rel (%p288) target = $region36
      $region35: #{tpu_custom_call.1} parent=5 // pred_region
        %s292 = ssub.s32 %s25, 1
        %s293 = sand.u32 %s52, 1
        %s294 = scalar_lea.sflag [#allocation3], %s293
        %s295 = sand.u32 %s52, 1
        %s296 = smul.addr %s295, 16
        %s297 = scalar_lea.vmem [#allocation2], %s296
        // Predicated region
        $region37: #{tpu_custom_call.1} parent=35 // pred_check
          %p298 = pneg %p65
        $region38: #{tpu_custom_call.1} parent=35 // pred_check_branch
          %300 = sbr.rel (%p298) target = $region40
        $region39: #{tpu_custom_call.1} parent=35 // pred_region
          %302 = dma.done %s294, 256
        $region40: #{tpu_custom_call.1} parent=35 // pred_fallthru
          _
        %s303 = sand.u32 %s30, 1
        %s304 = scalar_lea.sflag [#allocation6], %s303
        %s305 = sand.u32 %s80, 1
        %s306 = smul.addr %s305, 16
        %s307 = scalar_lea.vmem [#allocation5], %s306
        // Predicated region
        $region41: #{tpu_custom_call.1} parent=35 // pred_check
          %p308 = pneg %p93
        $region42: #{tpu_custom_call.1} parent=35 // pred_check_branch
          %310 = sbr.rel (%p308) target = $region44
        $region43: #{tpu_custom_call.1} parent=35 // pred_region
          %312 = dma.done %s304, 256
        $region44: #{tpu_custom_call.1} parent=35 // pred_fallthru
          _
        // Predicated region
        $region45: #{tpu_custom_call.1} parent=35 // pred_check
          %p313 = pneg %p114
        $region46: #{tpu_custom_call.1} parent=35 // pred_check_branch
          %315 = sbr.rel (%p313) target = $region48
        $region47: #{tpu_custom_call.1} parent=35 // pred_region
          %317 = dma.done [#allocation6], 256
        $region48: #{tpu_custom_call.1} parent=35 // pred_fallthru
          _
        // Predicated region
        $region49: #{tpu_custom_call.1} parent=35 // pred_check
          %p318 = pneg %p135
        $region50: #{tpu_custom_call.1} parent=35 // pred_check_branch
          %320 = sbr.rel (%p318) target = $region52
        $region51: #{tpu_custom_call.1} parent=35 // pred_region
          %322 = dma.done [#allocation9], 256
        $region52: #{tpu_custom_call.1} parent=35 // pred_fallthru
          _
        %s323 = sand.u32 %s52, 1
        %s324 = scalar_lea.sflag [#allocation3], %s323
        %s325 = sand.u32 %s52, 1
        %s326 = smul.addr %s325, 16
        %s327 = scalar_lea.vmem [#allocation2], %s326
        %p328 = pneg %p65
        %p329 = pneg %p62
        %s330 = sand.u32 %s30, 1
        %s331 = scalar_lea.sflag [#allocation6], %s330
        %s332 = sand.u32 %s80, 1
        %s333 = smul.addr %s332, 16
        %s334 = scalar_lea.vmem [#allocation5], %s333
        %p335 = pneg %p93
        %p336 = pneg %p90
        %p337 = pneg %p114
        %p338 = pneg %p111
        %p339 = pneg %p135
        %p340 = pneg %p132
        %p341 = pneg %p163
        %p342 = pneg %p160
        %s343 = sand.u32 %s150, 1
        %s344 = scalar_lea.sflag [#allocation4], %s343
        %s345 = sand.u32 %s150, 1
        %s346 = smul.addr %s345, 8
        %s347 = scalar_lea.vmem [#allocation10], %s346
        %p348 = pneg %p191
        %p349 = pneg %p188
        %s350 = sand.u32 %s178, 1
        %s351 = scalar_lea.sflag [#allocation12], %s350
        %s352 = sand.u32 %s178, 1
        %s353 = smul.addr %s352, 8
        %s354 = scalar_lea.vmem [#allocation11], %s353
        %s355 = smul.u32 2, %s35
        %s356 = smul.u32 2, %s35
        %s357 = smul.u32 2, %s35
        %s358 = smul.u32 2, %s35
        %v360 = vld [vmem:[%s297] sm:$0xff]
        %v361 = vld [vmem:[%s297 + $0x8] sm:$0xff]
        %v362 = vpack.c.bf16 %v361, %v360
        %v363 = vld [vmem:[#allocation7] sm:$0xf]
        %v364 = vld [vmem:[#allocation7 + $0x4] sm:$0xf]
        %v365 = vld [vmem:[#allocation7 + $0x8] sm:$0xf]
        %v366 = vld [vmem:[#allocation7 + $0xc] sm:$0xf]
        %v371 = vunpack.c.l.b16 %v363
        %v372 = vunpack.c.l.b16 %v364
        %v373 = vunpack.c.l.b16 %v365
        %v374 = vunpack.c.l.b16 %v366
        %v375 = vpack.c.b16 %v372, %v371
        %v376 = vpack.c.b16 %v374, %v373
        %vm379 = vcmask 261120
        %v381 = vsel %vm379, %v362, 0
        %383 = vmatpush.bf16.msra.mxu0 0
        %384 = vmatpush.bf16.msra.mxu0 0
        %385 = vmatpush.bf16.msra.mxu0 0
        %386 = vmatpush.bf16.msra.mxu0 0
        %387 = vmatpush.bf16.msra.mxu0 0
        %388 = vmatpush.bf16.msra.mxu0 0
        %389 = vmatpush.bf16.msra.mxu0 %v376
        %390 = vmatpush.bf16.msra.mxu0 %v375
        %391 = vmatmul.bf16.gmra.mxu0 %v381
        %v392 = vpop.f32.mrf.mxu0
        %v393 = vadd.f32 0.0, %v392
        %v394 = vpop.f32.mrf.mxu0
        %v395 = vadd.f32 0.0, %v394
        %396 = vdwg.mxu0
        %v397 = vpack.c.bf16 %v393, %v393
        %v398 = vpack.c.bf16 %v395, %v395
        %vm399 = vcmask 519168
        %400 = vst.msk [vmem:[%s347] sm:$0xf] %vm399, %v397
        %401 = vst.msk [vmem:[%s347 + $0x4] sm:$0xf] %vm399, %v398
        %v402 = vld [vmem:[%s307] sm:$0xff]
        %v403 = vld [vmem:[%s307 + $0x8] sm:$0xff]
        %v404 = vpack.c.bf16 %v403, %v402
        %v405 = vld [vmem:[#allocation8] sm:$0xf]
        %v406 = vld [vmem:[#allocation8 + $0x4] sm:$0xf]
        %v407 = vld [vmem:[#allocation8 + $0x8] sm:$0xf]
        %v408 = vld [vmem:[#allocation8 + $0xc] sm:$0xf]
        %v413 = vunpack.c.l.b16 %v405
        %v414 = vunpack.c.l.b16 %v406
        %v415 = vunpack.c.l.b16 %v407
        %v416 = vunpack.c.l.b16 %v408
        %v417 = vpack.c.b16 %v414, %v413
        %v418 = vpack.c.b16 %v416, %v415
        %v422 = vsel %vm379, %v404, 0
        %424 = vmatpush.bf16.msra.mxu0 0
        %425 = vmatpush.bf16.msra.mxu0 0
        %426 = vmatpush.bf16.msra.mxu0 0
        %427 = vmatpush.bf16.msra.mxu0 0
        %428 = vmatpush.bf16.msra.mxu0 0
        %429 = vmatpush.bf16.msra.mxu0 0
        %430 = vmatpush.bf16.msra.mxu0 %v418
        %431 = vmatpush.bf16.msra.mxu0 %v417
        %432 = vmatmul.bf16.gmra.mxu0 %v422
        %v433 = vpop.f32.mrf.mxu0
        %v434 = vadd.f32 0.0, %v433
        %v435 = vpop.f32.mrf.mxu0
        %v436 = vadd.f32 0.0, %v435
        %437 = vdwg.mxu0
        %v438 = vpack.c.bf16 %v434, %v434
        %v439 = vpack.c.bf16 %v436, %v436
        %440 = vst.msk [vmem:[%s354] sm:$0xf] %vm399, %v438
        %441 = vst.msk [vmem:[%s354 + $0x4] sm:$0xf] %vm399, %v439
        %s442 = sand.u32 %s150, 1
        %s443 = scalar_lea.sflag [#allocation4], %s442
        %s444 = sand.u32 %s150, 1
        %s445 = smul.addr %s444, 8
        %s446 = scalar_lea.vmem [#allocation10], %s445
        %s447 = sand.u32 %s178, 1
        %s448 = scalar_lea.sflag [#allocation12], %s447
        %s449 = sand.u32 %s178, 1
        %s450 = smul.addr %s449, 8
        %s451 = scalar_lea.vmem [#allocation11], %s450
        // Predicated region
        $region53: #{tpu_custom_call.1} parent=35 // pred_check
          %p452 = pneg %p160
        $region54: #{tpu_custom_call.1} parent=35 // pred_check_branch
          %454 = sbr.rel (%p452) target = $region56
        $region55: #{tpu_custom_call.1} parent=35 // pred_region
          %s455 = smul.u32 2, %s35
          %457 = vsyncadd %s443, 0
          %s458 = smul.addr %s34, 2
          %s459 = sadd.s32 %s455, %s458
          %s460 = smul.addr %s459, 4
          %s461 = scalar_lea.hbm %s4, %s460
          %s462 = sshll.u32 %s446, 4
          %s463 = int_to_ptr.vmem [resolvable:$true] %s462
          %s464 = sshll.u32 %s461, 4
          %s465 = int_to_ptr.hbm [resolvable:$true] %s464
          %470 = dma.vmem_to_hbm [thread:$0]  %s463, 128, %s465, %s443, 64, 64, 4
        $region56: #{tpu_custom_call.1} parent=35 // pred_fallthru
          _
        // Predicated region
        $region57: #{tpu_custom_call.1} parent=35 // pred_check
          %p471 = pneg %p188
        $region58: #{tpu_custom_call.1} parent=35 // pred_check_branch
          %473 = sbr.rel (%p471) target = $region60
        $region59: #{tpu_custom_call.1} parent=35 // pred_region
          %s474 = smul.u32 2, %s35
          %476 = vsyncadd %s448, 0
          %s477 = smul.addr %s34, 2
          %s478 = sadd.s32 %s474, %s477
          %s479 = smul.addr %s478, 4
          %s480 = scalar_lea.hbm %s5, %s479
          %s481 = sshll.u32 %s451, 4
          %s482 = int_to_ptr.vmem [resolvable:$true] %s481
          %s483 = sshll.u32 %s480, 4
          %s484 = int_to_ptr.hbm [resolvable:$true] %s483
          %489 = dma.vmem_to_hbm [thread:$0]  %s482, 128, %s484, %s448, 64, 64, 4
        $region60: #{tpu_custom_call.1} parent=35 // pred_fallthru
          _
      $region36: #{tpu_custom_call.1} parent=5 // pred_fallthru
        _
      %p490 = scmp.le.s32.totalorder 2, %s25
      // Predicated region
      $region61: #{tpu_custom_call.1} parent=5 // pred_check
        %p491 = pneg %p490
      $region62: #{tpu_custom_call.1} parent=5 // pred_check_branch
        %493 = sbr.rel (%p491) target = $region64
      $region63: #{tpu_custom_call.1} parent=5 // pred_region
        %s494 = ssub.s32 %s25, 2
        // Predicated region
        $region65: #{tpu_custom_call.1} parent=63 // pred_check
          %p495 = pneg %p166
        $region66: #{tpu_custom_call.1} parent=63 // pred_check_branch
          %497 = sbr.rel (%p495) target = $region68
        $region67: #{tpu_custom_call.1} parent=63 // pred_region
          %s498 = sand.u32 %s151, 1
          %s499 = scalar_lea.sflag [#allocation4], %s498
          %s500 = sand.u32 %s151, 1
          %s501 = smul.addr %s500, 8
          %s502 = scalar_lea.vmem [#allocation10], %s501
          %504 = dma.done %s499, 128
        $region68: #{tpu_custom_call.1} parent=63 // pred_fallthru
          _
        // Predicated region
        $region69: #{tpu_custom_call.1} parent=63 // pred_check
          %p505 = pneg %p194
        $region70: #{tpu_custom_call.1} parent=63 // pred_check_branch
          %507 = sbr.rel (%p505) target = $region72
        $region71: #{tpu_custom_call.1} parent=63 // pred_region
          %s508 = sand.u32 %s179, 1
          %s509 = scalar_lea.sflag [#allocation12], %s508
          %s510 = sand.u32 %s179, 1
          %s511 = smul.addr %s510, 8
          %s512 = scalar_lea.vmem [#allocation11], %s511
          %514 = dma.done %s509, 128
        $region72: #{tpu_custom_call.1} parent=63 // pred_fallthru
          _
      $region64: #{tpu_custom_call.1} parent=5 // pred_fallthru
        _
    $region6: #{tpu_custom_call.1} parent=1 // loop_footer
      %s29 = sadd.s32 1, %s25
    $region7: #{tpu_custom_call.1} parent=1 // loop_footer_branch
      %24 = sbr.rel target = $region3
    $region8: #{tpu_custom_call.1} parent=1 // loop_exit
      _
    %515 = vsyncpa [#allocation3], 1
    %s516 = scalar_lea.sflag [#allocation3], 1
    %517 = vsyncpa %s516, 1
    %518 = vsyncpa [#allocation6], 1
    %s519 = scalar_lea.sflag [#allocation6], 1
    %520 = vsyncpa %s519, 1
    %521 = vsyncpa [#allocation9], 1
    %522 = vsyncpa [#allocation4], 1
    %s523 = scalar_lea.sflag [#allocation4], 1
    %524 = vsyncpa %s523, 1
    %525 = vsyncpa [#allocation12], 1
    %s526 = scalar_lea.sflag [#allocation12], 1
    %527 = vsyncpa %s526, 1

// kernel: tpu_custom_call.1
$region0: #{tpu_custom_call.1}
  #allocation0 [shape = 'u32[]', space=smem, size = 0x4, offset = 0x4, fixed_abs, tag = 'smem constant byte address 0x4 - core index']
  #allocation1 [shape = 'u32[72,128]{1,0:T(1,128)}', space=vmem, size = 0x9000, scoped, tag = 'internal scratch']
  %s0 = inlined_call_operand.hbm [shape: f32[2,16,32], index: 0, kind: input, shape index: {}]
  %s1 = inlined_call_operand.hbm [shape: f32[2,16,32], index: 1, kind: input, shape index: {}]
  %s2 = inlined_call_operand.hbm [shape: bf16[32,64], index: 2, kind: input, shape index: {}]
  %s3 = inlined_call_operand.hbm [shape: bf16[32,64], index: 3, kind: input, shape index: {}]
  %s4 = inlined_call_operand.hbm [shape: bf16[2,16,64], index: 4, kind: output, shape index: {0}]
  %s5 = inlined_call_operand.hbm [shape: bf16[2,16,64], index: 5, kind: output, shape index: {1}]
  %6 = xla_tuple %s4, %s5
  %s7 = sld [smem:[#allocation0]]
  $region73: #{tpu_custom_call.1} parent=0
    _
  %s9 = ssub.s32 1, %s7
  %s10 = scalar_select 0, %s9, %s7
  $region1: #{tpu_custom_call.1} parent=0
    #allocation2 [shape = 'u8[16384]{0}', space=vmem, size = 0x4000, scoped, tag = 'input window, operand 0']
    #allocation3 [shape = 's32[2]{0}', space=sflag, size = 0x8, scoped, tag = 'scoped memory for tpu_custom_call.1']
    #allocation4 [shape = 's32[2]{0}', space=sflag, size = 0x8, scoped, tag = 'scoped memory for tpu_custom_call.1']
    #allocation5 [shape = 'u8[16384]{0}', space=vmem, size = 0x4000, scoped, tag = 'input window, operand 1']
    #allocation6 [shape = 's32[2]{0}', space=sflag, size = 0x8, scoped, tag = 'scoped memory for tpu_custom_call.1']
    #allocation7 [shape = 'u8[8192]{0}', space=vmem, size = 0x2000, scoped, tag = 'input window, operand 2, single buffered']
    #allocation8 [shape = 'u8[8192]{0}', space=vmem, size = 0x2000, scoped, tag = 'input window, operand 3, single buffered']
    #allocation9 [shape = 's32[1]{0}', space=sflag, size = 0x4, scoped, tag = 'scoped memory for tpu_custom_call.1']
    #allocation10 [shape = 'u8[8192]{0}', space=vmem, size = 0x2000, scoped, tag = 'output window, operand 0']
    #allocation11 [shape = 'u8[8192]{0}', space=vmem, size = 0x2000, scoped, tag = 'output window, operand 1']
    #allocation12 [shape = 's32[2]{0}', space=sflag, size = 0x8, scoped, tag = 'scoped memory for tpu_custom_call.1']
    %11 = vsyncpa [#allocation3], 0
    %s12 = scalar_lea.sflag [#allocation3], 1
    %13 = vsyncpa %s12, 0
    %14 = vsyncpa [#allocation6], 0
    %s15 = scalar_lea.sflag [#allocation6], 1
    %16 = vsyncpa %s15, 0
    %17 = vsyncpa [#allocation9], 0
    %18 = vsyncpa [#allocation4], 0
    %s19 = scalar_lea.sflag [#allocation4], 1
    %20 = vsyncpa %s19, 0
    %21 = vsyncpa [#allocation12], 0
    %s22 = scalar_lea.sflag [#allocation12], 1
    %23 = vsyncpa %s22, 0
    loop: start=0, step=1, limit=4
    $region2: #{tpu_custom_call.1} parent=1 // loop_pre_header
      _
    $region3: #{tpu_custom_call.1} parent=1 // loop_header
      %s25 = sphi 0, %s29
      %p26 = scmp.ge.s32.totalorder %s25, 4
      %s32 = sphi 0, %s44
      %s33 = sphi 0, %s40
      %s34 = sphi 0, %s32
      %s35 = sphi 0, %s33
      %s36 = sphi 0, %s34
      %s37 = sphi 0, %s35
      %s49 = sphi 0, %s51
      %s52 = sphi 0, %s49
      %s53 = sphi 0, %s52
      %s69 = sphi 0, %s53
      %s77 = sphi 0, %s79
      %s80 = sphi 0, %s77
      %s81 = sphi 0, %s80
      %s97 = sphi 0, %s81
      %s101 = sphi 0, %s101
      %s103 = sphi 0, %s101
      %s104 = sphi 0, %s103
      %s118 = sphi 0, %s104
      %s122 = sphi 0, %s122
      %s124 = sphi 0, %s122
      %s125 = sphi 0, %s124
      %s139 = sphi 0, %s125
      %s147 = sphi 0, %s149
      %s150 = sphi 0, %s147
      %s151 = sphi 0, %s150
      %s167 = sphi 0, %s151
      %s175 = sphi 0, %s177
      %s178 = sphi 0, %s175
      %s179 = sphi 0, %s178
      %s195 = sphi 0, %s179
    $region4: #{tpu_custom_call.1} parent=1 // loop_header_branch
      %28 = sbr.rel (%p26) target = $region8
    $region5: #{tpu_custom_call.1} parent=1 // loop_body
      %s30 = ssub.s32 %s25, 1
      %s31 = ssub.s32 %s25, 2
      %s38 = sadd.s32 1, %s33
      %p39 = scmp.ge.s32.totalorder %s38, 1
      %s40 = scalar_select %p39, 0, %s38
      %s41 = sadd.s32 1, %s32
      %s42 = scalar_select %p39, %s41, %s32
      %p43 = scmp.ge.s32.totalorder %s42, 2
      %s44 = scalar_select %p43, 0, %s42
      %s45 = ssub.s32 %s32, %s44
      %s46 = ssub.s32 %s33, %s40
      %s47 = sor.u32 %s45, %s46
      %p48 = scmp.eq.s32.totalorder %s47, 0
      %s50 = sadd.s32 %s49, 1
      %s51 = scalar_select %p48, %s49, %s50
      %p54 = pneg %p48
      %p55 = scmp.eq.s32.totalorder %s25, 1
      %p56 = por %p54, %p55
      %p57 = scmp.ne.s32.totalorder %s49, %s52
      %p58 = scmp.eq.s32.totalorder %s25, 0
      %p59 = por %p57, %p58
      %p60 = scmp.ne.s32.totalorder %s49, %s52
      %p61 = scmp.eq.s32.totalorder %s30, 1
      %p62 = por %p60, %p61
      %p63 = scmp.ne.s32.totalorder %s52, %s53
      %p64 = scmp.eq.s32.totalorder %s30, 0
      %p65 = por %p63, %p64
      %p66 = scmp.ne.s32.totalorder %s52, %s53
      %p67 = scmp.eq.s32.totalorder %s31, 1
      %p68 = por %p66, %p67
      %p70 = scmp.ne.s32.totalorder %s53, %s69
      %p71 = scmp.eq.s32.totalorder %s31, 0
      %p72 = por %p70, %p71
      %s73 = ssub.s32 %s32, %s44
      %s74 = ssub.s32 %s33, %s40
      %s75 = sor.u32 %s73, %s74
      %p76 = scmp.eq.s32.totalorder %s75, 0
      %s78 = sadd.s32 %s77, 1
      %s79 = scalar_select %p76, %s77, %s78
      %p82 = pneg %p76
      %p83 = scmp.eq.s32.totalorder %s25, 1
      %p84 = por %p82, %p83
      %p85 = scmp.ne.s32.totalorder %s77, %s80
      %p86 = scmp.eq.s32.totalorder %s25, 0
      %p87 = por %p85, %p86
      %p88 = scmp.ne.s32.totalorder %s77, %s80
      %p89 = scmp.eq.s32.totalorder %s30, 1
      %p90 = por %p88, %p89
      %p91 = scmp.ne.s32.totalorder %s80, %s81
      %p92 = scmp.eq.s32.totalorder %s30, 0
      %p93 = por %p91, %p92
      %p94 = scmp.ne.s32.totalorder %s80, %s81
      %p95 = scmp.eq.s32.totalorder %s31, 1
      %p96 = por %p94, %p95
      %p98 = scmp.ne.s32.totalorder %s81, %s97
      %p99 = scmp.eq.s32.totalorder %s31, 0
      %p100 = por %p98, %p99
      %s102 = sadd.s32 %s101, 1
      %p105 = scmp.eq.s32.totalorder %s25, 1
      %p106 = scmp.ne.s32.totalorder %s101, %s103
      %p107 = scmp.eq.s32.totalorder %s25, 0
      %p108 = por %p106, %p107
      %p109 = scmp.ne.s32.totalorder %s101, %s103
      %p110 = scmp.eq.s32.totalorder %s30, 1
      %p111 = por %p109, %p110
      %p112 = scmp.ne.s32.totalorder %s103, %s104
      %p113 = scmp.eq.s32.totalorder %s30, 0
      %p114 = por %p112, %p113
      %p115 = scmp.ne.s32.totalorder %s103, %s104
      %p116 = scmp.eq.s32.totalorder %s31, 1
      %p117 = por %p115, %p116
      %p119 = scmp.ne.s32.totalorder %s104, %s118
      %p120 = scmp.eq.s32.totalorder %s31, 0
      %p121 = por %p119, %p120
      %s123 = sadd.s32 %s122, 1
      %p126 = scmp.eq.s32.totalorder %s25, 1
      %p127 = scmp.ne.s32.totalorder %s122, %s124
      %p128 = scmp.eq.s32.totalorder %s25, 0
      %p129 = por %p127, %p128
      %p130 = scmp.ne.s32.totalorder %s122, %s124
      %p131 = scmp.eq.s32.totalorder %s30, 1
      %p132 = por %p130, %p131
      %p133 = scmp.ne.s32.totalorder %s124, %s125
      %p134 = scmp.eq.s32.totalorder %s30, 0
      %p135 = por %p133, %p134
      %p136 = scmp.ne.s32.totalorder %s124, %s125
      %p137 = scmp.eq.s32.totalorder %s31, 1
      %p138 = por %p136, %p137
      %p140 = scmp.ne.s32.totalorder %s125, %s139
      %p141 = scmp.eq.s32.totalorder %s31, 0
      %p142 = por %p140, %p141
      %s143 = ssub.s32 %s32, %s44
      %s144 = ssub.s32 %s33, %s40
      %s145 = sor.u32 %s143, %s144
      %p146 = scmp.eq.s32.totalorder %s145, 0
      %s148 = sadd.s32 %s147, 1
      %s149 = scalar_select %p146, %s147, %s148
      %p152 = pneg %p146
      %p153 = scmp.eq.s32.totalorder %s25, 1
      %p154 = por %p152, %p153
      %p155 = scmp.ne.s32.totalorder %s147, %s150
      %p156 = scmp.eq.s32.totalorder %s25, 0
      %p157 = por %p155, %p156
      %p158 = scmp.ne.s32.totalorder %s147, %s150
      %p159 = scmp.eq.s32.totalorder %s30, 1
      %p160 = por %p158, %p159
      %p161 = scmp.ne.s32.totalorder %s150, %s151
      %p162 = scmp.eq.s32.totalorder %s30, 0
      %p163 = por %p161, %p162
      %p164 = scmp.ne.s32.totalorder %s150, %s151
      %p165 = scmp.eq.s32.totalorder %s31, 1
      %p166 = por %p164, %p165
      %p168 = scmp.ne.s32.totalorder %s151, %s167
      %p169 = scmp.eq.s32.totalorder %s31, 0
      %p170 = por %p168, %p169
      %s171 = ssub.s32 %s32, %s44
      %s172 = ssub.s32 %s33, %s40
      %s173 = sor.u32 %s171, %s172
      %p174 = scmp.eq.s32.totalorder %s173, 0
      %s176 = sadd.s32 %s175, 1
      %s177 = scalar_select %p174, %s175, %s176
      %p180 = pneg %p174
      %p181 = scmp.eq.s32.totalorder %s25, 1
      %p182 = por %p180, %p181
      %p183 = scmp.ne.s32.totalorder %s175, %s178
      %p184 = scmp.eq.s32.totalorder %s25, 0
      %p185 = por %p183, %p184
      %p186 = scmp.ne.s32.totalorder %s175, %s178
      %p187 = scmp.eq.s32.totalorder %s30, 1
      %p188 = por %p186, %p187
      %p189 = scmp.ne.s32.totalorder %s178, %s179
      %p190 = scmp.eq.s32.totalorder %s30, 0
      %p191 = por %p189, %p190
      %p192 = scmp.ne.s32.totalorder %s178, %s179
      %p193 = scmp.eq.s32.totalorder %s31, 1
      %p194 = por %p192, %p193
      %p196 = scmp.ne.s32.totalorder %s179, %s195
      %p197 = scmp.eq.s32.totalorder %s31, 0
      %p198 = por %p196, %p197
      %p199 = scmp.le.s32.totalorder 1, %s25
      %p200 = scmp.lt.s32.totalorder %s25, 3
      %p201 = pnand %p199, %p200
      %p202 = pneg %p201
      // Predicated region
      $region9: #{tpu_custom_call.1} parent=5 // pred_check
        _
      $region10: #{tpu_custom_call.1} parent=5 // pred_check_branch
        %204 = sbr.rel (%p201) target = $region12
      $region11: #{tpu_custom_call.1} parent=5 // pred_region
        %s205 = ssub.s32 %s25, 1
        // Predicated region
        $region13: #{tpu_custom_call.1} parent=11 // pred_check
          %p206 = pneg %p114
        $region14: #{tpu_custom_call.1} parent=11 // pred_check_branch
          %208 = sbr.rel (%p206) target = $region16
        $region15: #{tpu_custom_call.1} parent=11 // pred_region
          %210 = vsyncadd [#allocation6], 0
          %s211 = sshll.u32 %s2, 4
          %s212 = int_to_ptr.hbm [resolvable:$true] %s211
          %s213 = sshll.u32 [#allocation7], 4
          %s214 = int_to_ptr.vmem [resolvable:$true] %s213
          %219 = dma.hbm_to_vmem [thread:$0]  %s212, 256, %s214, [#allocation6], 64, 64, 4
        $region16: #{tpu_custom_call.1} parent=11 // pred_fallthru
          _
        // Predicated region
        $region17: #{tpu_custom_call.1} parent=11 // pred_check
          %p220 = pneg %p135
        $region18: #{tpu_custom_call.1} parent=11 // pred_check_branch
          %222 = sbr.rel (%p220) target = $region20
        $region19: #{tpu_custom_call.1} parent=11 // pred_region
          %224 = vsyncadd [#allocation9], 0
          %s225 = sshll.u32 %s3, 4
          %s226 = int_to_ptr.hbm [resolvable:$true] %s225
          %s227 = sshll.u32 [#allocation8], 4
          %s228 = int_to_ptr.vmem [resolvable:$true] %s227
          %233 = dma.hbm_to_vmem [thread:$0]  %s226, 256, %s228, [#allocation9], 64, 64, 4
        $region20: #{tpu_custom_call.1} parent=11 // pred_fallthru
          _
      $region12: #{tpu_custom_call.1} parent=5 // pred_fallthru
        _
      %p234 = scmp.lt.s32.totalorder %s25, 2
      // Predicated region
      $region21: #{tpu_custom_call.1} parent=5 // pred_check
        %p235 = pneg %p234
      $region22: #{tpu_custom_call.1} parent=5 // pred_check_branch
        %237 = sbr.rel (%p235) target = $region24
      $region23: #{tpu_custom_call.1} parent=5 // pred_region
        // Predicated region
        $region25: #{tpu_custom_call.1} parent=23 // pred_check
          %p238 = pneg %p59
        $region26: #{tpu_custom_call.1} parent=23 // pred_check_branch
          %240 = sbr.rel (%p238) target = $region28
        $region27: #{tpu_custom_call.1} parent=23 // pred_region
          %s241 = sand.u32 %s49, 1
          %s242 = scalar_lea.sflag [#allocation3], %s241
          %s243 = sand.u32 %s49, 1
          %s244 = smul.addr %s243, 16
          %s245 = scalar_lea.vmem [#allocation2], %s244
          %s246 = smul.u32 2, %s33
          %248 = vsyncadd %s242, 0
          %s249 = smul.addr %s32, 2
          %s250 = sadd.s32 %s246, %s249
          %s251 = smul.addr %s250, 8
          %s252 = scalar_lea.hbm %s0, %s251
          %s253 = sshll.u32 %s252, 4
          %s254 = int_to_ptr.hbm [resolvable:$true] %s253
          %s255 = sshll.u32 %s245, 4
          %s256 = int_to_ptr.vmem [resolvable:$true] %s255
          %261 = dma.hbm_to_vmem [thread:$0]  %s254, 256, %s256, %s242, 128, 128, 8
        $region28: #{tpu_custom_call.1} parent=23 // pred_fallthru
          _
        // Predicated region
        $region29: #{tpu_custom_call.1} parent=23 // pred_check
          %p262 = pneg %p87
        $region30: #{tpu_custom_call.1} parent=23 // pred_check_branch
          %264 = sbr.rel (%p262) target = $region32
        $region31: #{tpu_custom_call.1} parent=23 // pred_region
          %s265 = sand.u32 %s25, 1
          %s266 = scalar_lea.sflag [#allocation6], %s265
          %s267 = sand.u32 %s77, 1
          %s268 = smul.addr %s267, 16
          %s269 = scalar_lea.vmem [#allocation5], %s268
          %s270 = smul.u32 2, %s33
          %272 = vsyncadd %s266, 0
          %s273 = smul.addr %s32, 2
          %s274 = sadd.s32 %s270, %s273
          %s275 = smul.addr %s274, 8
          %s276 = scalar_lea.hbm %s1, %s275
          %s277 = sshll.u32 %s276, 4
          %s278 = int_to_ptr.hbm [resolvable:$true] %s277
          %s279 = sshll.u32 %s269, 4
          %s280 = int_to_ptr.vmem [resolvable:$true] %s279
          %285 = dma.hbm_to_vmem [thread:$0]  %s278, 256, %s280, %s266, 128, 128, 8
        $region32: #{tpu_custom_call.1} parent=23 // pred_fallthru
          _
      $region24: #{tpu_custom_call.1} parent=5 // pred_fallthru
        _
      %p286 = scmp.le.s32.totalorder 1, %s25
      %p287 = scmp.lt.s32.totalorder %s25, 3
      %p288 = pnand %p286, %p287
      %p289 = pneg %p288
      // Predicated region
      $region33: #{tpu_custom_call.1} parent=5 // pred_check
        _
      $region34: #{tpu_custom_call.1} parent=5 // pred_check_branch
        %291 = sbr.rel (%p288) target = $region36
      $region35: #{tpu_custom_call.1} parent=5 // pred_region
        %s292 = ssub.s32 %s25, 1
        %s293 = sand.u32 %s52, 1
        %s294 = scalar_lea.sflag [#allocation3], %s293
        %s295 = sand.u32 %s52, 1
        %s296 = smul.addr %s295, 16
        %s297 = scalar_lea.vmem [#allocation2], %s296
        // Predicated region
        $region37: #{tpu_custom_call.1} parent=35 // pred_check
          %p298 = pneg %p65
        $region38: #{tpu_custom_call.1} parent=35 // pred_check_branch
          %300 = sbr.rel (%p298) target = $region40
        $region39: #{tpu_custom_call.1} parent=35 // pred_region
          %302 = dma.done %s294, 256
        $region40: #{tpu_custom_call.1} parent=35 // pred_fallthru
          _
        %s303 = sand.u32 %s30, 1
        %s304 = scalar_lea.sflag [#allocation6], %s303
        %s305 = sand.u32 %s80, 1
        %s306 = smul.addr %s305, 16
        %s307 = scalar_lea.vmem [#allocation5], %s306
        // Predicated region
        $region41: #{tpu_custom_call.1} parent=35 // pred_check
          %p308 = pneg %p93
        $region42: #{tpu_custom_call.1} parent=35 // pred_check_branch
          %310 = sbr.rel (%p308) target = $region44
        $region43: #{tpu_custom_call.1} parent=35 // pred_region
          %312 = dma.done %s304, 256
        $region44: #{tpu_custom_call.1} parent=35 // pred_fallthru
          _
        // Predicated region
        $region45: #{tpu_custom_call.1} parent=35 // pred_check
          %p313 = pneg %p114
        $region46: #{tpu_custom_call.1} parent=35 // pred_check_branch
          %315 = sbr.rel (%p313) target = $region48
        $region47: #{tpu_custom_call.1} parent=35 // pred_region
          %317 = dma.done [#allocation6], 256
        $region48: #{tpu_custom_call.1} parent=35 // pred_fallthru
          _
        // Predicated region
        $region49: #{tpu_custom_call.1} parent=35 // pred_check
          %p318 = pneg %p135
        $region50: #{tpu_custom_call.1} parent=35 // pred_check_branch
          %320 = sbr.rel (%p318) target = $region52
        $region51: #{tpu_custom_call.1} parent=35 // pred_region
          %322 = dma.done [#allocation9], 256
        $region52: #{tpu_custom_call.1} parent=35 // pred_fallthru
          _
        %s323 = sand.u32 %s52, 1
        %s324 = scalar_lea.sflag [#allocation3], %s323
        %s325 = sand.u32 %s52, 1
        %s326 = smul.addr %s325, 16
        %s327 = scalar_lea.vmem [#allocation2], %s326
        %p328 = pneg %p65
        %p329 = pneg %p62
        %s330 = sand.u32 %s30, 1
        %s331 = scalar_lea.sflag [#allocation6], %s330
        %s332 = sand.u32 %s80, 1
        %s333 = smul.addr %s332, 16
        %s334 = scalar_lea.vmem [#allocation5], %s333
        %p335 = pneg %p93
        %p336 = pneg %p90
        %p337 = pneg %p114
        %p338 = pneg %p111
        %p339 = pneg %p135
        %p340 = pneg %p132
        %p341 = pneg %p163
        %p342 = pneg %p160
        %s343 = sand.u32 %s150, 1
        %s344 = scalar_lea.sflag [#allocation4], %s343
        %s345 = sand.u32 %s150, 1
        %s346 = smul.addr %s345, 8
        %s347 = scalar_lea.vmem [#allocation10], %s346
        %p348 = pneg %p191
        %p349 = pneg %p188
        %s350 = sand.u32 %s178, 1
        %s351 = scalar_lea.sflag [#allocation12], %s350
        %s352 = sand.u32 %s178, 1
        %s353 = smul.addr %s352, 8
        %s354 = scalar_lea.vmem [#allocation11], %s353
        %s355 = smul.u32 2, %s35
        %s356 = smul.u32 2, %s35
        %s357 = smul.u32 2, %s35
        %s358 = smul.u32 2, %s35
        %v360 = vld [vmem:[%s297] sm:$0xff]
        %v361 = vld [vmem:[%s297 + $0x8] sm:$0xff]
        %v362 = vpack.c.bf16 %v361, %v360
        %v363 = vld [vmem:[#allocation7] sm:$0xf]
        %v364 = vld [vmem:[#allocation7 + $0x4] sm:$0xf]
        %v365 = vld [vmem:[#allocation7 + $0x8] sm:$0xf]
        %v366 = vld [vmem:[#allocation7 + $0xc] sm:$0xf]
        %v371 = vunpack.c.l.b16 %v363
        %v372 = vunpack.c.l.b16 %v364
        %v373 = vunpack.c.l.b16 %v365
        %v374 = vunpack.c.l.b16 %v366
        %v375 = vpack.c.b16 %v372, %v371
        %v376 = vpack.c.b16 %v374, %v373
        %vm379 = vcmask 261120
        %v381 = vsel %vm379, %v362, 0
        %383 = vmatpush.bf16.msra.mxu0 0
        %384 = vmatpush.bf16.msra.mxu0 0
        %385 = vmatpush.bf16.msra.mxu0 0
        %386 = vmatpush.bf16.msra.mxu0 0
        %387 = vmatpush.bf16.msra.mxu0 0
        %388 = vmatpush.bf16.msra.mxu0 0
        %389 = vmatpush.bf16.msra.mxu0 %v376
        %390 = vmatpush.bf16.msra.mxu0 %v375
        %391 = vmatmul.bf16.gmra.mxu0 %v381
        %v392 = vpop.f32.mrf.mxu0
        %v393 = vadd.f32 0.0, %v392
        %v394 = vpop.f32.mrf.mxu0
        %v395 = vadd.f32 0.0, %v394
        %396 = vdwg.mxu0
        %v397 = vpack.c.bf16 %v393, %v393
        %v398 = vpack.c.bf16 %v395, %v395
        %vm399 = vcmask 519168
        %400 = vst.msk [vmem:[%s347] sm:$0xf] %vm399, %v397
        %401 = vst.msk [vmem:[%s347 + $0x4] sm:$0xf] %vm399, %v398
        %v402 = vld [vmem:[%s307] sm:$0xff]
        %v403 = vld [vmem:[%s307 + $0x8] sm:$0xff]
        %v404 = vpack.c.bf16 %v403, %v402
        %v405 = vld [vmem:[#allocation8] sm:$0xf]
        %v406 = vld [vmem:[#allocation8 + $0x4] sm:$0xf]
        %v407 = vld [vmem:[#allocation8 + $0x8] sm:$0xf]
        %v408 = vld [vmem:[#allocation8 + $0xc] sm:$0xf]
        %v413 = vunpack.c.l.b16 %v405
        %v414 = vunpack.c.l.b16 %v406
        %v415 = vunpack.c.l.b16 %v407
        %v416 = vunpack.c.l.b16 %v408
        %v417 = vpack.c.b16 %v414, %v413
        %v418 = vpack.c.b16 %v416, %v415
        %v422 = vsel %vm379, %v404, 0
        %424 = vmatpush.bf16.msra.mxu0 0
        %425 = vmatpush.bf16.msra.mxu0 0
        %426 = vmatpush.bf16.msra.mxu0 0
        %427 = vmatpush.bf16.msra.mxu0 0
        %428 = vmatpush.bf16.msra.mxu0 0
        %429 = vmatpush.bf16.msra.mxu0 0
        %430 = vmatpush.bf16.msra.mxu0 %v418
        %431 = vmatpush.bf16.msra.mxu0 %v417
        %432 = vmatmul.bf16.gmra.mxu0 %v422
        %v433 = vpop.f32.mrf.mxu0
        %v434 = vadd.f32 0.0, %v433
        %v435 = vpop.f32.mrf.mxu0
        %v436 = vadd.f32 0.0, %v435
        %437 = vdwg.mxu0
        %v438 = vpack.c.bf16 %v434, %v434
        %v439 = vpack.c.bf16 %v436, %v436
        %440 = vst.msk [vmem:[%s354] sm:$0xf] %vm399, %v438
        %441 = vst.msk [vmem:[%s354 + $0x4] sm:$0xf] %vm399, %v439
        %s442 = sand.u32 %s150, 1
        %s443 = scalar_lea.sflag [#allocation4], %s442
        %s444 = sand.u32 %s150, 1
        %s445 = smul.addr %s444, 8
        %s446 = scalar_lea.vmem [#allocation10], %s445
        %s447 = sand.u32 %s178, 1
        %s448 = scalar_lea.sflag [#allocation12], %s447
        %s449 = sand.u32 %s178, 1
        %s450 = smul.addr %s449, 8
        %s451 = scalar_lea.vmem [#allocation11], %s450
        // Predicated region
        $region53: #{tpu_custom_call.1} parent=35 // pred_check
          %p452 = pneg %p160
        $region54: #{tpu_custom_call.1} parent=35 // pred_check_branch
          %454 = sbr.rel (%p452) target = $region56
        $region55: #{tpu_custom_call.1} parent=35 // pred_region
          %s455 = smul.u32 2, %s35
          %457 = vsyncadd %s443, 0
          %s458 = smul.addr %s34, 2
          %s459 = sadd.s32 %s455, %s458
          %s460 = smul.addr %s459, 4
          %s461 = scalar_lea.hbm %s4, %s460
          %s462 = sshll.u32 %s446, 4
          %s463 = int_to_ptr.vmem [resolvable:$true] %s462
          %s464 = sshll.u32 %s461, 4
          %s465 = int_to_ptr.hbm [resolvable:$true] %s464
          %470 = dma.vmem_to_hbm [thread:$0]  %s463, 128, %s465, %s443, 64, 64, 4
        $region56: #{tpu_custom_call.1} parent=35 // pred_fallthru
          _
        // Predicated region
        $region57: #{tpu_custom_call.1} parent=35 // pred_check
          %p471 = pneg %p188
        $region58: #{tpu_custom_call.1} parent=35 // pred_check_branch
          %473 = sbr.rel (%p471) target = $region60
        $region59: #{tpu_custom_call.1} parent=35 // pred_region
          %s474 = smul.u32 2, %s35
          %476 = vsyncadd %s448, 0
          %s477 = smul.addr %s34, 2
          %s478 = sadd.s32 %s474, %s477
          %s479 = smul.addr %s478, 4
          %s480 = scalar_lea.hbm %s5, %s479
          %s481 = sshll.u32 %s451, 4
          %s482 = int_to_ptr.vmem [resolvable:$true] %s481
          %s483 = sshll.u32 %s480, 4
          %s484 = int_to_ptr.hbm [resolvable:$true] %s483
          %489 = dma.vmem_to_hbm [thread:$0]  %s482, 128, %s484, %s448, 64, 64, 4
        $region60: #{tpu_custom_call.1} parent=35 // pred_fallthru
          _
      $region36: #{tpu_custom_call.1} parent=5 // pred_fallthru
        _
      %p490 = scmp.le.s32.totalorder 2, %s25
      // Predicated region
      $region61: #{tpu_custom_call.1} parent=5 // pred_check
        %p491 = pneg %p490
      $region62: #{tpu_custom_call.1} parent=5 // pred_check_branch
        %493 = sbr.rel (%p491) target = $region64
      $region63: #{tpu_custom_call.1} parent=5 // pred_region
        %s494 = ssub.s32 %s25, 2
        // Predicated region
        $region65: #{tpu_custom_call.1} parent=63 // pred_check
          %p495 = pneg %p166
        $region66: #{tpu_custom_call.1} parent=63 // pred_check_branch
          %497 = sbr.rel (%p495) target = $region68
        $region67: #{tpu_custom_call.1} parent=63 // pred_region
          %s498 = sand.u32 %s151, 1
          %s499 = scalar_lea.sflag [#allocation4], %s498
          %s500 = sand.u32 %s151, 1
          %s501 = smul.addr %s500, 8
          %s502 = scalar_lea.vmem [#allocation10], %s501
          %504 = dma.done %s499, 128
        $region68: #{tpu_custom_call.1} parent=63 // pred_fallthru
          _
        // Predicated region
        $region69: #{tpu_custom_call.1} parent=63 // pred_check
          %p505 = pneg %p194
        $region70: #{tpu_custom_call.1} parent=63 // pred_check_branch
          %507 = sbr.rel (%p505) target = $region72
        $region71: #{tpu_custom_call.1} parent=63 // pred_region
          %s508 = sand.u32 %s179, 1
          %s509 = scalar_lea.sflag [#allocation12], %s508
          %s510 = sand.u32 %s179, 1
          %s511 = smul.addr %s510, 8
          %s512 = scalar_lea.vmem [#allocation11], %s511
          %514 = dma.done %s509, 128
        $region72: #{tpu_custom_call.1} parent=63 // pred_fallthru
          _
      $region64: #{tpu_custom_call.1} parent=5 // pred_fallthru
        _
    $region6: #{tpu_custom_call.1} parent=1 // loop_footer
      %s29 = sadd.s32 1, %s25
    $region7: #{tpu_custom_call.1} parent=1 // loop_footer_branch
      %24 = sbr.rel target = $region3
    $region8: #{tpu_custom_call.1} parent=1 // loop_exit
      _
    %515 = vsyncpa [#allocation3], 1
    %s516 = scalar_lea.sflag [#allocation3], 1
    %517 = vsyncpa %s516, 1
    %518 = vsyncpa [#allocation6], 1
    %s519 = scalar_lea.sflag [#allocation6], 1
    %520 = vsyncpa %s519, 1
    %521 = vsyncpa [#allocation9], 1
    %522 = vsyncpa [#allocation4], 1
    %s523 = scalar_lea.sflag [#allocation4], 1
    %524 = vsyncpa %s523, 1
    %525 = vsyncpa [#allocation12], 1
    %s526 = scalar_lea.sflag [#allocation12], 1
    %527 = vsyncpa %s526, 1

</llo_original>
